<compile_context>
chip_gen: v7x
topology: tpu7x:2x2x1
jax: 0.10.0
libtpu: 0.0.40
codegen_flags: <defaults>
</compile_context>

<pallas_src>
import functools

import jax
import jax.numpy as jnp
from jax import lax
from jax.experimental import pallas as pl
from jax.experimental.pallas import tpu as pltpu


def _round_up(n, m):
    return ((n + m - 1) // m) * m


def _layer_norm_kernel(x_ref, g_ref, b_ref, o_ref, *, eps):
    # Normalize each row (token) of the (TM, d_model) tile over the last axis.
    x = x_ref[...].astype(jnp.float32)                     # (TM, d_model)
    mean = jnp.mean(x, axis=-1, keepdims=True)             # (TM, 1)
    xc = x - mean
    var = jnp.mean(xc * xc, axis=-1, keepdims=True)        # biased variance (torch default)
    inv = lax.rsqrt(var + eps)                             # EUP rsqrt
    y = xc * inv * g_ref[...] + b_ref[...]                 # broadcast (1, d_model) params
    o_ref[...] = y.astype(o_ref.dtype)


def layer_norm(x, gamma, beta, *, eps=1e-6, block_rows=256):
    """x: [B, S, d_model]; gamma, beta: [d_model]. Returns [B, S, d_model],
    matching nn.LayerNorm(d_model, eps) forward semantics."""
    B, S, d_model = x.shape
    M = B * S

    x2d = x.reshape(M, d_model)

    # Token-tile size: multiple of 8 sublanes, capped by block_rows, no larger
    # than needed for small inputs.
    TM = min(block_rows, _round_up(M, 8))
    Mp = _round_up(M, TM)
    if Mp != M:
        # Pad the token dimension rather than shrinking TM; padded rows are
        # cheap (just normalized zeros) and sliced off below.
        x2d = jnp.pad(x2d, ((0, Mp - M), (0, 0)))

    g2d = gamma.reshape(1, d_model)
    b2d = beta.reshape(1, d_model)

    grid = (Mp // TM,)

    itemsize = jnp.dtype(x.dtype).itemsize
    cost = pl.CostEstimate(
        flops=8 * Mp * d_model,
        transcendentals=Mp,  # one rsqrt per token row
        bytes_accessed=2 * Mp * d_model * itemsize + 2 * d_model * 4,
    )

    out = pl.pallas_call(
        functools.partial(_layer_norm_kernel, eps=eps),
        out_shape=jax.ShapeDtypeStruct((Mp, d_model), x.dtype),
        grid_spec=pltpu.PrefetchScalarGridSpec(
            num_scalar_prefetch=0,
            grid=grid,
            in_specs=[
                # x tile marches over the token dimension.
                pl.BlockSpec((TM, d_model), lambda i: (i, 0)),
                # gamma / beta: constant index_map -> resident in VMEM.
                pl.BlockSpec((1, d_model), lambda i: (0, 0)),
                pl.BlockSpec((1, d_model), lambda i: (0, 0)),
            ],
            out_specs=pl.BlockSpec((TM, d_model), lambda i: (i, 0)),
        ),
        compiler_params=pltpu.CompilerParams(
            # Independent token tiles -> shard across TensorCores (v7x megacore).
            dimension_semantics=("parallel",),
            vmem_limit_bytes=64 * 1024 * 1024,
        ),
        cost_estimate=cost,
    )(x2d, g2d, b2d)

    if Mp != M:
        out = out[:M]
    return out.reshape(B, S, d_model)

    # TODO(synk): for production d_model not a multiple of 128, pad the feature
    # dim (with masking in the mean/var) to get fully lane-dense unmasked stores.


def _reference(x, gamma, beta, eps=1e-6):
    mean = jnp.mean(x, axis=-1, keepdims=True)
    var = jnp.mean((x - mean) ** 2, axis=-1, keepdims=True)
    return (x - mean) / jnp.sqrt(var + eps) * gamma + beta


if __name__ == "__main__":
    # Small shapes consistent with the module: tokens of size d_model.
    B, S, d_model = 2, 8, 32

    key = jax.random.PRNGKey(0)
    kx, kg, kb = jax.random.split(key, 3)

    x = jax.random.normal(kx, (B, S, d_model), dtype=jnp.float32)
    # nn.LayerNorm params: weight (gamma) init ~1, bias (beta) init ~0; perturb
    # them so the affine part is actually exercised.
    gamma = 1.0 + 0.1 * jax.random.normal(kg, (d_model,), dtype=jnp.float32)
    beta = 0.1 * jax.random.normal(kb, (d_model,), dtype=jnp.float32)

    y = layer_norm(x, gamma, beta, eps=1e-6)
    jax.block_until_ready(y)

    y_ref = _reference(x, gamma, beta, eps=1e-6)
    assert y.shape == (B, S, d_model)
    assert jnp.allclose(y, y_ref, atol=1e-5, rtol=1e-5), "mismatch vs reference"

    print("KERNEL_OK")
</pallas_src>

<mosaic_0001>
module attributes {stable_mosaic.version = 11 : i64} {
  func.func @_layer_norm_kernel(%arg0: i32, %arg1: memref<16x32xf32, #tpu.memory_space<vmem>>, %arg2: memref<1x32xf32, #tpu.memory_space<vmem>>, %arg3: memref<1x32xf32, #tpu.memory_space<vmem>>, %arg4: memref<16x32xf32, #tpu.memory_space<vmem>>) attributes {dimension_semantics = [#tpu.dimension_semantics<parallel>], iteration_bounds = array<i64: 1>, scalar_prefetch = 0 : i64, scratch_operands = 0 : i64, tpu.core_type = #tpu.core_type<tc>, window_params = [{transform_indices = @transform_0, window_bounds = array<i64: 16, 32>}, {pipeline_mode = #tpu.pipeline_mode<synchronous>, transform_indices = @transform_1, window_bounds = array<i64: 1, 32>}, {pipeline_mode = #tpu.pipeline_mode<synchronous>, transform_indices = @transform_2, window_bounds = array<i64: 1, 32>}, {transform_indices = @transform_3, window_bounds = array<i64: 16, 32>}]} {
    %c0 = arith.constant 0 : index
    %c0_0 = arith.constant 0 : index
    %0 = vector.load %arg1[%c0, %c0_0] : memref<16x32xf32, #tpu.memory_space<vmem>>, vector<16x32xf32>
    %cst = arith.constant dense<0.000000e+00> : vector<16xf32>
    %1 = vector.multi_reduction <add>, %0, %cst [1] : vector<16x32xf32> to vector<16xf32>
    %2 = vector.shape_cast %1 : vector<16xf32> to vector<16x1xf32>
    %cst_1 = arith.constant 3.200000e+01 : f32
    %3 = vector.broadcast %cst_1 : f32 to vector<16x1xf32>
    %4 = arith.divf %2, %3 : vector<16x1xf32>
    %5 = vector.broadcast %4 : vector<16x1xf32> to vector<16x32xf32>
    %6 = arith.subf %0, %5 : vector<16x32xf32>
    %7 = arith.mulf %6, %6 : vector<16x32xf32>
    %cst_2 = arith.constant dense<0.000000e+00> : vector<16xf32>
    %8 = vector.multi_reduction <add>, %7, %cst_2 [1] : vector<16x32xf32> to vector<16xf32>
    %9 = vector.shape_cast %8 : vector<16xf32> to vector<16x1xf32>
    %cst_3 = arith.constant 3.200000e+01 : f32
    %10 = vector.broadcast %cst_3 : f32 to vector<16x1xf32>
    %11 = arith.divf %9, %10 : vector<16x1xf32>
    %cst_4 = arith.constant 9.99999997E-7 : f32
    %12 = vector.broadcast %cst_4 : f32 to vector<16x1xf32>
    %13 = arith.addf %11, %12 : vector<16x1xf32>
    %14 = math.rsqrt %13 : vector<16x1xf32>
    %15 = vector.broadcast %14 : vector<16x1xf32> to vector<16x32xf32>
    %16 = arith.mulf %6, %15 : vector<16x32xf32>
    %c0_5 = arith.constant 0 : index
    %c0_6 = arith.constant 0 : index
    %17 = vector.load %arg2[%c0_5, %c0_6] : memref<1x32xf32, #tpu.memory_space<vmem>>, vector<1x32xf32>
    %18 = vector.broadcast %17 : vector<1x32xf32> to vector<16x32xf32>
    %19 = arith.mulf %16, %18 : vector<16x32xf32>
    %c0_7 = arith.constant 0 : index
    %c0_8 = arith.constant 0 : index
    %20 = vector.load %arg3[%c0_7, %c0_8] : memref<1x32xf32, #tpu.memory_space<vmem>>, vector<1x32xf32>
    %21 = vector.broadcast %20 : vector<1x32xf32> to vector<16x32xf32>
    %22 = arith.addf %19, %21 : vector<16x32xf32>
    %c0_9 = arith.constant 0 : index
    %c0_10 = arith.constant 0 : index
    %23 = vector.load %arg4[%c0_9, %c0_10] : memref<16x32xf32, #tpu.memory_space<vmem>>, vector<16x32xf32>
    tpu.vector_store %arg4[%c0_9, %c0_10], %22 {strides = array<i32>} : memref<16x32xf32, #tpu.memory_space<vmem>>, vector<16x32xf32>,
    return
  }
  func.func @transform_0(%arg0: i32) -> (i32, i32) {
    %c0_i32 = arith.constant 0 : i32
    %c0_i32_0 = arith.constant 0 : i32
    return %arg0, %c0_i32 : i32, i32
  }
  func.func @transform_1(%arg0: i32) -> (i32, i32) {
    %c0_i32 = arith.constant 0 : i32
    %c0_i32_0 = arith.constant 0 : i32
    %c0_i32_1 = arith.constant 0 : i32
    return %c0_i32, %c0_i32_0 : i32, i32
  }
  func.func @transform_2(%arg0: i32) -> (i32, i32) {
    %c0_i32 = arith.constant 0 : i32
    %c0_i32_0 = arith.constant 0 : i32
    %c0_i32_1 = arith.constant 0 : i32
    return %c0_i32, %c0_i32_0 : i32, i32
  }
  func.func @transform_3(%arg0: i32) -> (i32, i32) {
    %c0_i32 = arith.constant 0 : i32
    %c0_i32_0 = arith.constant 0 : i32
    return %arg0, %c0_i32 : i32, i32
  }
}

</mosaic_0001>

<llo_original>
// kernel: tpu_custom_call.1
$region0: #{tpu_custom_call.1}
  #allocation0 [shape = 'u32[]', space=smem, size = 0x4, offset = 0x4, fixed_abs, tag = 'smem constant byte address 0x4 - core index']
  #allocation1 [shape = 'u32[144,128]{1,0:T(1,128)}', space=vmem, size = 0x12000, scoped, tag = 'internal scratch']
  %s0 = inlined_call_operand.hbm [shape: f32[16,32], index: 0, kind: input, shape index: {}]
  %s1 = inlined_call_operand.hbm [shape: f32[1,32], index: 1, kind: input, shape index: {}]
  %s2 = inlined_call_operand.hbm [shape: f32[1,32], index: 2, kind: input, shape index: {}]
  %s3 = inlined_call_operand.hbm [shape: f32[16,32], index: 3, kind: output, shape index: {}]
  %s4 = sld [smem:[#allocation0]]
  $region34: #{tpu_custom_call.1} parent=0
    _
  %s6 = ssub.s32 1, %s4
  %s7 = scalar_select 0, %s6, %s4
  $region1: #{tpu_custom_call.1} parent=0
    #allocation2 [shape = 'u8[8192]{0}', space=vmem, size = 0x2000, scoped, tag = 'input window, operand 0, single buffered']
    #allocation3 [shape = 's32[1]{0}', space=sflag, size = 0x4, scoped, tag = 'scoped memory for tpu_custom_call.1']
    #allocation4 [shape = 's32[1]{0}', space=sflag, size = 0x4, scoped, tag = 'scoped memory for tpu_custom_call.1']
    #allocation5 [shape = 'u8[512]{0}', space=vmem, size = 0x400, scoped, tag = 'input window, operand 1, single buffered']
    #allocation6 [shape = 's32[1]{0}', space=sflag, size = 0x4, scoped, tag = 'scoped memory for tpu_custom_call.1']
    #allocation7 [shape = 'u8[512]{0}', space=vmem, size = 0x400, scoped, tag = 'input window, operand 2, single buffered']
    #allocation8 [shape = 'u8[8192]{0}', space=vmem, size = 0x2000, scoped, tag = 'output window, operand 0, single buffered']
    %8 = vsyncpa [#allocation3], 0
    %9 = vsyncpa [#allocation6], 0
    %10 = vsyncpa [#allocation4], 0
    // Predicated region
    $region2: #{tpu_custom_call.1} parent=1 // pred_check
      _
    $region3: #{tpu_custom_call.1} parent=1 // pred_check_branch
      %12 = sbr.rel (0) target = $region5
    $region4: #{tpu_custom_call.1} parent=1 // pred_region
      %s14 = ssub.s32 256, 256
      %15 = vsyncadd [#allocation3], %s14
      %s16 = sshll.u32 [#allocation2], 4
      %s17 = int_to_ptr.vmem [resolvable:$true] %s16
      %22 = dma.hbm_to_vmem [thread:$0]  %s0, 256, %s17, [#allocation3], 128, 128, 8
    $region5: #{tpu_custom_call.1} parent=1 // pred_fallthru
      _
    // Predicated region
    $region6: #{tpu_custom_call.1} parent=1 // pred_check
      _
    $region7: #{tpu_custom_call.1} parent=1 // pred_check_branch
      %24 = sbr.rel (0) target = $region9
    $region8: #{tpu_custom_call.1} parent=1 // pred_region
      %s26 = ssub.s32 16, 16
      %27 = vsyncadd [#allocation6], %s26
      %s29 = sshll.u32 [#allocation5], 4
      %s30 = int_to_ptr.vmem [resolvable:$true] %s29
      %32 = dma.hbm_to_vmem [thread:$0]  %s1, 16, %s30, [#allocation6]
    $region9: #{tpu_custom_call.1} parent=1 // pred_fallthru
      _
    // Predicated region
    $region10: #{tpu_custom_call.1} parent=1 // pred_check
      _
    $region11: #{tpu_custom_call.1} parent=1 // pred_check_branch
      %34 = sbr.rel (0) target = $region13
    $region12: #{tpu_custom_call.1} parent=1 // pred_region
      %s36 = ssub.s32 16, 16
      %37 = vsyncadd [#allocation6], %s36
      %s39 = sshll.u32 [#allocation7], 4
      %s40 = int_to_ptr.vmem [resolvable:$true] %s39
      %42 = dma.hbm_to_vmem [thread:$0]  %s2, 16, %s40, [#allocation6]
    $region13: #{tpu_custom_call.1} parent=1 // pred_fallthru
      _
    // Predicated region
    $region14: #{tpu_custom_call.1} parent=1 // pred_check
      _
    $region15: #{tpu_custom_call.1} parent=1 // pred_check_branch
      %44 = sbr.rel (0) target = $region17
    $region16: #{tpu_custom_call.1} parent=1 // pred_region
      %45 = dma.done [#allocation3], 256
    $region17: #{tpu_custom_call.1} parent=1 // pred_fallthru
      _
    // Predicated region
    $region18: #{tpu_custom_call.1} parent=1 // pred_check
      _
    $region19: #{tpu_custom_call.1} parent=1 // pred_check_branch
      %47 = sbr.rel (0) target = $region21
    $region20: #{tpu_custom_call.1} parent=1 // pred_region
      %48 = dma.done [#allocation6], 16
    $region21: #{tpu_custom_call.1} parent=1 // pred_fallthru
      _
    // Predicated region
    $region22: #{tpu_custom_call.1} parent=1 // pred_check
      _
    $region23: #{tpu_custom_call.1} parent=1 // pred_check_branch
      %50 = sbr.rel (0) target = $region25
    $region24: #{tpu_custom_call.1} parent=1 // pred_region
      %51 = dma.done [#allocation6], 16
    $region25: #{tpu_custom_call.1} parent=1 // pred_fallthru
      _
    %v52 = vld [vmem:[#allocation2] sm:$0xff]
    %v53 = vld [vmem:[#allocation2 + $0x8] sm:$0xff]
    %vm54 = vcmask 261120
    %v55 = vsel %vm54, %v52, 0.0
    %56 = vadd.xlane.f32.xlu0 %v55
    %v57 = vpop.xlane.xlu0 %56
    %v58 = vsel %vm54, %v53, 0.0
    %59 = vadd.xlane.f32.xlu0 %v58
    %v60 = vpop.xlane.xlu0 %59
    %v61 = vrcp.pop 32.0
    %v62 = vmul.f32 %v57, %v61
    %v63 = vmul.f32 %v60, %v61
    %v64 = vsub.f32 %v52, %v62
    %v65 = vsub.f32 %v53, %v63
    %v66 = vmul.f32 %v64, %v64
    %v67 = vmul.f32 %v65, %v65
    %v68 = vsel %vm54, %v66, 0.0
    %69 = vadd.xlane.f32.xlu0 %v68
    %v70 = vpop.xlane.xlu0 %69
    %v71 = vsel %vm54, %v67, 0.0
    %72 = vadd.xlane.f32.xlu0 %v71
    %v73 = vpop.xlane.xlu0 %72
    %v74 = vmul.f32 %v70, %v61
    %v75 = vmul.f32 %v73, %v61
    %v76 = vadd.f32 %v74, 1e-06
    %v77 = vadd.f32 %v75, 1e-06
    %v78 = vrsqrt.pop %v76
    %v79 = vrsqrt.pop %v77
    %v80 = vmul.f32 %v64, %v78
    %v81 = vmul.f32 %v65, %v79
    %v82 = vld [vmem:[#allocation5] sm:$0x1]
    %v84 = vlaneseq
    %v85 = vshrl.u32 %v84, 7
    %v86 = vsub.s32 0, %v85
    %v87 = vrot.slane %v82, %v86
    %v89 = vmul.f32 %v80, %v87
    %v90 = vmul.f32 %v81, %v87
    %v91 = vld [vmem:[#allocation7] sm:$0x1]
    %v93 = vlaneseq
    %v94 = vshrl.u32 %v93, 7
    %v95 = vsub.s32 0, %v94
    %v96 = vrot.slane %v91, %v95
    %v98 = vadd.f32 %v89, %v96
    %v99 = vadd.f32 %v90, %v96
    %100 = vst.msk [vmem:[#allocation8] sm:$0xff] %vm54, %v98
    %101 = vst.msk [vmem:[#allocation8 + $0x8] sm:$0xff] %vm54, %v99
    // Predicated region
    $region26: #{tpu_custom_call.1} parent=1 // pred_check
      _
    $region27: #{tpu_custom_call.1} parent=1 // pred_check_branch
      %103 = sbr.rel (0) target = $region29
    $region28: #{tpu_custom_call.1} parent=1 // pred_region
      %s105 = ssub.s32 256, 256
      %106 = vsyncadd [#allocation4], %s105
      %s107 = sshll.u32 [#allocation8], 4
      %s108 = int_to_ptr.vmem [resolvable:$true] %s107
      %113 = dma.vmem_to_hbm [thread:$0]  %s108, 256, %s3, [#allocation4], 128, 128, 8
    $region29: #{tpu_custom_call.1} parent=1 // pred_fallthru
      _
    // Predicated region
    $region30: #{tpu_custom_call.1} parent=1 // pred_check
      _
    $region31: #{tpu_custom_call.1} parent=1 // pred_check_branch
      %115 = sbr.rel (0) target = $region33
    $region32: #{tpu_custom_call.1} parent=1 // pred_region
      %116 = dma.done [#allocation4], 256
    $region33: #{tpu_custom_call.1} parent=1 // pred_fallthru
      _
    %117 = vsyncpa [#allocation3], 1
    %118 = vsyncpa [#allocation6], 1
    %119 = vsyncpa [#allocation4], 1

</llo_original>
